<compile_context>
chip_gen: v5e
topology: v5e:2x2
jax: 0.10.0
libtpu: 0.0.40
codegen_flags: <defaults>
</compile_context>

<pallas_src>
import jax
import jax.numpy as jnp
from jax.experimental import pallas as pl
from jax.experimental.pallas import tpu as pltpu

INPUT_DIM = 65  # tiny_shakespeare character vocabulary size (fixed in-script)
SEQ = 8         # sequence length for the example forward pass
LANE = 128      # TPU lane width; pad out-features (lane axis) to a multiple of this


def bigram_gather_kernel(ids_ref, wt_ref, out_ref):
    # ids_ref: (SEQ,)        int32  in SMEM  (token ids, scalar path)
    # wt_ref:  (VOCAB, VPAD) f32    in VMEM  (W.T, zero-padded on the lane axis)
    # out_ref: (SEQ,  VPAD)  f32    in VMEM
    seq = out_ref.shape[0]
    nrows = wt_ref.shape[0]
    # SEQ is tiny and static: fully unrolled loop of one dynamic-row load and
    # one lane-dense, unmasked store per token. Pure load/store slots.
    for i in range(seq):
        row = jnp.clip(ids_ref[i], 0, nrows - 1)   # guard against OOB VMEM reads
        out_ref[pl.ds(i, 1), :] = wt_ref[pl.ds(row, 1), :]


def pad_weights(w):
    """One-time (cold path) parameter prep.

    w: [vocab, vocab] float32 in torch nn.Linear convention [out_features, in_features].
    Returns W.T zero-padded on the out-features (lane) axis to a multiple of 128,
    shape [vocab, vpad]. Rows are indexed by token id; padded logit columns are 0.
    """
    vocab = w.shape[0]
    vpad = ((vocab + LANE - 1) // LANE) * LANE
    return jnp.zeros((vocab, vpad), jnp.float32).at[:, :vocab].set(
        w.T.astype(jnp.float32))


def net_forward_padded(ids, wt_pad):
    """Hot path: logits = W.T[ids], lane-dense.

    ids:    int array [SEQ] of token ids (assumed in-range [0, vocab)).
    wt_pad: [vocab, vpad] float32 from pad_weights (built once, reused).
    Returns padded logits [SEQ, vpad]; columns >= vocab are zero. Consumers
    (softmax/argmax) should restrict themselves to the first `vocab` columns.
    """
    seq = ids.shape[0]
    vpad = wt_pad.shape[1]
    ids_i32 = ids.astype(jnp.int32)

    return pl.pallas_call(
        bigram_gather_kernel,
        out_shape=jax.ShapeDtypeStruct((seq, vpad), jnp.float32),
        # Whole arrays fit trivially in VMEM/SMEM: single program, full blocks, no grid.
        in_specs=[pl.BlockSpec(memory_space=pltpu.MemorySpace.SMEM),
                  pl.BlockSpec(memory_space=pltpu.MemorySpace.VMEM)],
        out_specs=pl.BlockSpec(memory_space=pltpu.MemorySpace.VMEM),
    )(ids_i32, wt_pad)


def net_forward(ids, wt_pad, vocab):
    """Semantics-preserving equivalent of Net.forward: [SEQ, vocab] logits.

    (The narrow slice is a consumer-side convenience; keep net_forward_padded
    on the hot path if the downstream op can work on the padded slab.)
    """
    return net_forward_padded(ids, wt_pad)[:, :vocab]


if __name__ == "__main__":
    key = jax.random.PRNGKey(0)
    k_w, k_ids = jax.random.split(key)

    # Deterministic init matching torch.nn.Linear default: U(-1/sqrt(fan_in), 1/sqrt(fan_in))
    bound = 1.0 / jnp.sqrt(jnp.float32(INPUT_DIM))
    w = jax.random.uniform(k_w, (INPUT_DIM, INPUT_DIM),
                           minval=-bound, maxval=bound, dtype=jnp.float32)

    # Example token-id sequence (what torch.tensor(ids) would carry in `generate`)
    ids = jax.random.randint(k_ids, (SEQ,), 0, INPUT_DIM, dtype=jnp.int32)

    # Cold path: pad/transpose W once, outside the per-call forward.
    wt_pad = pad_weights(w)

    logits = net_forward(ids, wt_pad, INPUT_DIM)
    logits = jax.block_until_ready(logits)

    # Reference semantics: one_hot(ids) @ W.T == W.T[ids]
    ref = jnp.take(w.T, ids, axis=0)
    assert logits.shape == (SEQ, INPUT_DIM)
    assert jnp.allclose(logits, ref, atol=1e-5, rtol=1e-5)

    # TODO(synk): generate() (autoregressive sampling with torch.multinomial) is
    # host-side control flow and is not translated to a kernel.
    print("KERNEL_OK")
</pallas_src>

<mosaic_0001>
module attributes {stable_mosaic.version = 11 : i64} {
  func.func @bigram_gather_kernel(%arg0: memref<8xi32, #tpu.memory_space<smem>>, %arg1: memref<65x128xf32, #tpu.memory_space<vmem>>, %arg2: memref<8x128xf32, #tpu.memory_space<vmem>>) attributes {dimension_semantics = [], scalar_prefetch = 0 : i64, scratch_operands = 0 : i64, tpu.core_type = #tpu.core_type<tc>} {
    %c0 = arith.constant 0 : index
    %0 = memref.load %arg0[%c0] : memref<8xi32, #tpu.memory_space<smem>>
    %c0_i32 = arith.constant 0 : i32
    %c64_i32 = arith.constant 64 : i32
    %1 = arith.maxsi %c0_i32, %0 : i32
    %2 = arith.minsi %c64_i32, %1 : i32
    %3 = arith.index_cast %2 : i32 to index
    %c0_0 = arith.constant 0 : index
    %4 = vector.load %arg1[%3, %c0_0] : memref<65x128xf32, #tpu.memory_space<vmem>>, vector<1x128xf32>
    %c0_1 = arith.constant 0 : index
    %c0_2 = arith.constant 0 : index
    %5 = vector.load %arg2[%c0_1, %c0_2] : memref<8x128xf32, #tpu.memory_space<vmem>>, vector<1x128xf32>
    tpu.vector_store %arg2[%c0_1, %c0_2], %4 {strides = array<i32>} : memref<8x128xf32, #tpu.memory_space<vmem>>, vector<1x128xf32>,
    %c1 = arith.constant 1 : index
    %6 = memref.load %arg0[%c1] : memref<8xi32, #tpu.memory_space<smem>>
    %c0_i32_3 = arith.constant 0 : i32
    %c64_i32_4 = arith.constant 64 : i32
    %7 = arith.maxsi %c0_i32_3, %6 : i32
    %8 = arith.minsi %c64_i32_4, %7 : i32
    %9 = arith.index_cast %8 : i32 to index
    %c0_5 = arith.constant 0 : index
    %10 = vector.load %arg1[%9, %c0_5] : memref<65x128xf32, #tpu.memory_space<vmem>>, vector<1x128xf32>
    %c1_6 = arith.constant 1 : index
    %c0_7 = arith.constant 0 : index
    %11 = vector.load %arg2[%c1_6, %c0_7] : memref<8x128xf32, #tpu.memory_space<vmem>>, vector<1x128xf32>
    tpu.vector_store %arg2[%c1_6, %c0_7], %10 {strides = array<i32>} : memref<8x128xf32, #tpu.memory_space<vmem>>, vector<1x128xf32>,
    %c2 = arith.constant 2 : index
    %12 = memref.load %arg0[%c2] : memref<8xi32, #tpu.memory_space<smem>>
    %c0_i32_8 = arith.constant 0 : i32
    %c64_i32_9 = arith.constant 64 : i32
    %13 = arith.maxsi %c0_i32_8, %12 : i32
    %14 = arith.minsi %c64_i32_9, %13 : i32
    %15 = arith.index_cast %14 : i32 to index
    %c0_10 = arith.constant 0 : index
    %16 = vector.load %arg1[%15, %c0_10] : memref<65x128xf32, #tpu.memory_space<vmem>>, vector<1x128xf32>
    %c2_11 = arith.constant 2 : index
    %c0_12 = arith.constant 0 : index
    %17 = vector.load %arg2[%c2_11, %c0_12] : memref<8x128xf32, #tpu.memory_space<vmem>>, vector<1x128xf32>
    tpu.vector_store %arg2[%c2_11, %c0_12], %16 {strides = array<i32>} : memref<8x128xf32, #tpu.memory_space<vmem>>, vector<1x128xf32>,
    %c3 = arith.constant 3 : index
    %18 = memref.load %arg0[%c3] : memref<8xi32, #tpu.memory_space<smem>>
    %c0_i32_13 = arith.constant 0 : i32
    %c64_i32_14 = arith.constant 64 : i32
    %19 = arith.maxsi %c0_i32_13, %18 : i32
    %20 = arith.minsi %c64_i32_14, %19 : i32
    %21 = arith.index_cast %20 : i32 to index
    %c0_15 = arith.constant 0 : index
    %22 = vector.load %arg1[%21, %c0_15] : memref<65x128xf32, #tpu.memory_space<vmem>>, vector<1x128xf32>
    %c3_16 = arith.constant 3 : index
    %c0_17 = arith.constant 0 : index
    %23 = vector.load %arg2[%c3_16, %c0_17] : memref<8x128xf32, #tpu.memory_space<vmem>>, vector<1x128xf32>
    tpu.vector_store %arg2[%c3_16, %c0_17], %22 {strides = array<i32>} : memref<8x128xf32, #tpu.memory_space<vmem>>, vector<1x128xf32>,
    %c4 = arith.constant 4 : index
    %24 = memref.load %arg0[%c4] : memref<8xi32, #tpu.memory_space<smem>>
    %c0_i32_18 = arith.constant 0 : i32
    %c64_i32_19 = arith.constant 64 : i32
    %25 = arith.maxsi %c0_i32_18, %24 : i32
    %26 = arith.minsi %c64_i32_19, %25 : i32
    %27 = arith.index_cast %26 : i32 to index
    %c0_20 = arith.constant 0 : index
    %28 = vector.load %arg1[%27, %c0_20] : memref<65x128xf32, #tpu.memory_space<vmem>>, vector<1x128xf32>
    %c4_21 = arith.constant 4 : index
    %c0_22 = arith.constant 0 : index
    %29 = vector.load %arg2[%c4_21, %c0_22] : memref<8x128xf32, #tpu.memory_space<vmem>>, vector<1x128xf32>
    tpu.vector_store %arg2[%c4_21, %c0_22], %28 {strides = array<i32>} : memref<8x128xf32, #tpu.memory_space<vmem>>, vector<1x128xf32>,
    %c5 = arith.constant 5 : index
    %30 = memref.load %arg0[%c5] : memref<8xi32, #tpu.memory_space<smem>>
    %c0_i32_23 = arith.constant 0 : i32
    %c64_i32_24 = arith.constant 64 : i32
    %31 = arith.maxsi %c0_i32_23, %30 : i32
    %32 = arith.minsi %c64_i32_24, %31 : i32
    %33 = arith.index_cast %32 : i32 to index
    %c0_25 = arith.constant 0 : index
    %34 = vector.load %arg1[%33, %c0_25] : memref<65x128xf32, #tpu.memory_space<vmem>>, vector<1x128xf32>
    %c5_26 = arith.constant 5 : index
    %c0_27 = arith.constant 0 : index
    %35 = vector.load %arg2[%c5_26, %c0_27] : memref<8x128xf32, #tpu.memory_space<vmem>>, vector<1x128xf32>
    tpu.vector_store %arg2[%c5_26, %c0_27], %34 {strides = array<i32>} : memref<8x128xf32, #tpu.memory_space<vmem>>, vector<1x128xf32>,
    %c6 = arith.constant 6 : index
    %36 = memref.load %arg0[%c6] : memref<8xi32, #tpu.memory_space<smem>>
    %c0_i32_28 = arith.constant 0 : i32
    %c64_i32_29 = arith.constant 64 : i32
    %37 = arith.maxsi %c0_i32_28, %36 : i32
    %38 = arith.minsi %c64_i32_29, %37 : i32
    %39 = arith.index_cast %38 : i32 to index
    %c0_30 = arith.constant 0 : index
    %40 = vector.load %arg1[%39, %c0_30] : memref<65x128xf32, #tpu.memory_space<vmem>>, vector<1x128xf32>
    %c6_31 = arith.constant 6 : index
    %c0_32 = arith.constant 0 : index
    %41 = vector.load %arg2[%c6_31, %c0_32] : memref<8x128xf32, #tpu.memory_space<vmem>>, vector<1x128xf32>
    tpu.vector_store %arg2[%c6_31, %c0_32], %40 {strides = array<i32>} : memref<8x128xf32, #tpu.memory_space<vmem>>, vector<1x128xf32>,
    %c7 = arith.constant 7 : index
    %42 = memref.load %arg0[%c7] : memref<8xi32, #tpu.memory_space<smem>>
    %c0_i32_33 = arith.constant 0 : i32
    %c64_i32_34 = arith.constant 64 : i32
    %43 = arith.maxsi %c0_i32_33, %42 : i32
    %44 = arith.minsi %c64_i32_34, %43 : i32
    %45 = arith.index_cast %44 : i32 to index
    %c0_35 = arith.constant 0 : index
    %46 = vector.load %arg1[%45, %c0_35] : memref<65x128xf32, #tpu.memory_space<vmem>>, vector<1x128xf32>
    %c7_36 = arith.constant 7 : index
    %c0_37 = arith.constant 0 : index
    %47 = vector.load %arg2[%c7_36, %c0_37] : memref<8x128xf32, #tpu.memory_space<vmem>>, vector<1x128xf32>
    tpu.vector_store %arg2[%c7_36, %c0_37], %46 {strides = array<i32>} : memref<8x128xf32, #tpu.memory_space<vmem>>, vector<1x128xf32>,
    return
  }
}

</mosaic_0001>

<llo_original>
// kernel: tpu_custom_call.1
$region0: #{tpu_custom_call.1}
  #allocation0 [shape = 'u32[]', space=smem, size = 0x4, offset = 0x4, fixed_abs, tag = 'smem constant byte address 0x4 - core index']
  #allocation1 [shape = 'u32[72,128]{1,0:T(1,128)}', space=vmem, size = 0x9000, scoped, tag = 'internal scratch']
  %s0 = inlined_call_operand.hbm [shape: s32[8], index: 0, kind: input, shape index: {}]
  %s1 = inlined_call_operand.hbm [shape: f32[65,128], index: 1, kind: input, shape index: {}]
  %s2 = inlined_call_operand.hbm [shape: f32[8,128], index: 2, kind: output, shape index: {}]
  %s3 = sld [smem:[#allocation0]]
  $region26: #{tpu_custom_call.1} parent=0
    _
  %s5 = ssub.s32 1, %s3
  %s6 = scalar_select 0, %s5, %s3
  $region1: #{tpu_custom_call.1} parent=0
    #allocation2 [shape = 'u8[512]{0}', space=smem, size = 0x200, scoped, tag = 'input window, operand 0, single buffered']
    #allocation3 [shape = 's32[1]{0}', space=sflag, size = 0x4, scoped, tag = 'scoped memory for tpu_custom_call.1']
    #allocation4 [shape = 's32[1]{0}', space=sflag, size = 0x4, scoped, tag = 'scoped memory for tpu_custom_call.1']
    #allocation5 [shape = 's32[1]{0}', space=sflag, size = 0x4, scoped, tag = 'scoped memory for tpu_custom_call.1']
    #allocation6 [shape = 'u8[36864]{0}', space=vmem, size = 0x9000, scoped, tag = 'input window, operand 1, single buffered']
    #allocation7 [shape = 'u8[4096]{0}', space=vmem, size = 0x1000, scoped, tag = 'output window, operand 0, single buffered']
    %7 = vsyncpa [#allocation5], 0
    %8 = vsyncpa [#allocation3], 0
    %9 = vsyncpa [#allocation4], 0
    // Predicated region
    $region2: #{tpu_custom_call.1} parent=1 // pred_check
      _
    $region3: #{tpu_custom_call.1} parent=1 // pred_check_branch
      %11 = sbr.rel (0) target = $region5
    $region4: #{tpu_custom_call.1} parent=1 // pred_region
      %13 = vsyncadd [#allocation5], 0
      %s15 = sshll.u32 %s0, 4
      %s16 = int_to_ptr.hbm [resolvable:$true] %s15
      %18 = dma.hbm_to_smem %s16, 16, [#allocation2], [#allocation5]
    $region5: #{tpu_custom_call.1} parent=1 // pred_fallthru
      _
    // Predicated region
    $region6: #{tpu_custom_call.1} parent=1 // pred_check
      _
    $region7: #{tpu_custom_call.1} parent=1 // pred_check_branch
      %20 = sbr.rel (0) target = $region9
    $region8: #{tpu_custom_call.1} parent=1 // pred_region
      %22 = vsyncadd [#allocation3], 0
      %s23 = sshll.u32 %s1, 4
      %s24 = int_to_ptr.hbm [resolvable:$true] %s23
      %s25 = sshll.u32 [#allocation6], 4
      %s26 = int_to_ptr.vmem [resolvable:$true] %s25
      %31 = dma.hbm_to_vmem [thread:$0]  %s24, 1152, %s26, [#allocation3], 128, 128, 8
    $region9: #{tpu_custom_call.1} parent=1 // pred_fallthru
      _
    // Predicated region
    $region10: #{tpu_custom_call.1} parent=1 // pred_check
      _
    $region11: #{tpu_custom_call.1} parent=1 // pred_check_branch
      %33 = sbr.rel (0) target = $region13
    $region12: #{tpu_custom_call.1} parent=1 // pred_region
      %35 = dma.done [#allocation5], 16
    $region13: #{tpu_custom_call.1} parent=1 // pred_fallthru
      _
    // Predicated region
    $region14: #{tpu_custom_call.1} parent=1 // pred_check
      _
    $region15: #{tpu_custom_call.1} parent=1 // pred_check_branch
      %37 = sbr.rel (0) target = $region17
    $region16: #{tpu_custom_call.1} parent=1 // pred_region
      %39 = dma.done [#allocation3], 1152
    $region17: #{tpu_custom_call.1} parent=1 // pred_fallthru
      _
    %40 = sfence
    %s41 = sld [smem:[#allocation2]]
    %p42 = scmp.gt.s32.totalorder %s41, 0
    %s43 = scalar_select %p42, %s41, 0
    %p44 = scmp.lt.s32.totalorder %s43, 64
    %s45 = scalar_select %p44, %s43, 64
    %s46 = scalar_lea.vmem [#allocation6], %s45
    %v47 = vld [vmem:[%s46] sm:$0x1]
    %48 = vst [vmem:[#allocation7] sm:$0x1] %v47
    %s49 = sld [smem:[#allocation2 + $0x1]]
    %p50 = scmp.gt.s32.totalorder %s49, 0
    %s51 = scalar_select %p50, %s49, 0
    %p52 = scmp.lt.s32.totalorder %s51, 64
    %s53 = scalar_select %p52, %s51, 64
    %s54 = scalar_lea.vmem [#allocation6], %s53
    %v55 = vld [vmem:[%s54] sm:$0x1]
    %56 = vst [vmem:[#allocation7 + $0x1] sm:$0x1] %v55
    %s57 = sld [smem:[#allocation2 + $0x2]]
    %p58 = scmp.gt.s32.totalorder %s57, 0
    %s59 = scalar_select %p58, %s57, 0
    %p60 = scmp.lt.s32.totalorder %s59, 64
    %s61 = scalar_select %p60, %s59, 64
    %s62 = scalar_lea.vmem [#allocation6], %s61
    %v63 = vld [vmem:[%s62] sm:$0x1]
    %64 = vst [vmem:[#allocation7 + $0x2] sm:$0x1] %v63
    %s65 = sld [smem:[#allocation2 + $0x3]]
    %p66 = scmp.gt.s32.totalorder %s65, 0
    %s67 = scalar_select %p66, %s65, 0
    %p68 = scmp.lt.s32.totalorder %s67, 64
    %s69 = scalar_select %p68, %s67, 64
    %s70 = scalar_lea.vmem [#allocation6], %s69
    %v71 = vld [vmem:[%s70] sm:$0x1]
    %72 = vst [vmem:[#allocation7 + $0x3] sm:$0x1] %v71
    %s73 = sld [smem:[#allocation2 + $0x4]]
    %p74 = scmp.gt.s32.totalorder %s73, 0
    %s75 = scalar_select %p74, %s73, 0
    %p76 = scmp.lt.s32.totalorder %s75, 64
    %s77 = scalar_select %p76, %s75, 64
    %s78 = scalar_lea.vmem [#allocation6], %s77
    %v79 = vld [vmem:[%s78] sm:$0x1]
    %80 = vst [vmem:[#allocation7 + $0x4] sm:$0x1] %v79
    %s81 = sld [smem:[#allocation2 + $0x5]]
    %p82 = scmp.gt.s32.totalorder %s81, 0
    %s83 = scalar_select %p82, %s81, 0
    %p84 = scmp.lt.s32.totalorder %s83, 64
    %s85 = scalar_select %p84, %s83, 64
    %s86 = scalar_lea.vmem [#allocation6], %s85
    %v87 = vld [vmem:[%s86] sm:$0x1]
    %88 = vst [vmem:[#allocation7 + $0x5] sm:$0x1] %v87
    %s89 = sld [smem:[#allocation2 + $0x6]]
    %p90 = scmp.gt.s32.totalorder %s89, 0
    %s91 = scalar_select %p90, %s89, 0
    %p92 = scmp.lt.s32.totalorder %s91, 64
    %s93 = scalar_select %p92, %s91, 64
    %s94 = scalar_lea.vmem [#allocation6], %s93
    %v95 = vld [vmem:[%s94] sm:$0x1]
    %96 = vst [vmem:[#allocation7 + $0x6] sm:$0x1] %v95
    %s97 = sld [smem:[#allocation2 + $0x7]]
    %p98 = scmp.gt.s32.totalorder %s97, 0
    %s99 = scalar_select %p98, %s97, 0
    %p100 = scmp.lt.s32.totalorder %s99, 64
    %s101 = scalar_select %p100, %s99, 64
    %s102 = scalar_lea.vmem [#allocation6], %s101
    %v103 = vld [vmem:[%s102] sm:$0x1]
    %104 = vst [vmem:[#allocation7 + $0x7] sm:$0x1] %v103
    // Predicated region
    $region18: #{tpu_custom_call.1} parent=1 // pred_check
      _
    $region19: #{tpu_custom_call.1} parent=1 // pred_check_branch
      %106 = sbr.rel (0) target = $region21
    $region20: #{tpu_custom_call.1} parent=1 // pred_region
      %108 = vsyncadd [#allocation4], 0
      %s110 = sshll.u32 [#allocation7], 4
      %s111 = int_to_ptr.vmem [resolvable:$true] %s110
      %s112 = sshll.u32 %s2, 4
      %s113 = int_to_ptr.hbm [resolvable:$true] %s112
      %115 = dma.vmem_to_hbm [thread:$0]  %s111, 128, %s113, [#allocation4]
    $region21: #{tpu_custom_call.1} parent=1 // pred_fallthru
      _
    // Predicated region
    $region22: #{tpu_custom_call.1} parent=1 // pred_check
      _
    $region23: #{tpu_custom_call.1} parent=1 // pred_check_branch
      %117 = sbr.rel (0) target = $region25
    $region24: #{tpu_custom_call.1} parent=1 // pred_region
      %119 = dma.done [#allocation4], 128
    $region25: #{tpu_custom_call.1} parent=1 // pred_fallthru
      _
    %120 = vsyncpa [#allocation3], 1
    %121 = vsyncpa [#allocation4], 1
    %122 = vsyncpa [#allocation5], 1

</llo_original>
